<compile_context>
chip_gen: v5e
topology: v5e:2x2
jax: 0.10.0
libtpu: 0.0.40
codegen_flags: <defaults>
</compile_context>

<pallas_src>
import math

import numpy as np
import jax
import jax.numpy as jnp
from jax.experimental import pallas as pl
from jax.experimental.pallas import tpu as pltpu

# ----------------------------- config ---------------------------------------
B, T, C, N_HEAD = 2, 8, 32, 4
HEAD_DIM = C // N_HEAD
N = B * T  # flattened batch*sequence rows

# ---- packed parameter buffer layout (all row offsets are multiples of 8) ----
P_ROWS, P_COLS = 96, 128
R_WATTN = 0    # rows  0:32, cols 0:96  -> w_attn (q-columns pre-scaled)
R_BATTN = 32   # row  32,    cols 0:96  -> b_attn
R_WPROJ = 40   # rows 40:72, cols 0:32  -> w_proj
R_BPROJ = 72   # row  72,    cols 0:32  -> b_proj
R_MASK = 80    # rows 80:96, cols 0:16  -> additive block-diag causal mask (0 / -1e30)


def attention_kernel(x_ref, p_ref, o_ref):
    x = x_ref[...]                                            # (N, C)

    # Static, tile-aligned slices of the single packed parameter buffer.
    w_attn = p_ref[R_WATTN:R_WATTN + C, 0:3 * C]              # (C, 3C)
    b_attn = p_ref[R_BATTN:R_BATTN + 1, 0:3 * C]              # (1, 3C)
    w_proj = p_ref[R_WPROJ:R_WPROJ + C, 0:C]                  # (C, C)
    b_proj = p_ref[R_BPROJ:R_BPROJ + 1, 0:C]                  # (1, C)
    mask_b = p_ref[R_MASK:R_MASK + N, 0:N]                    # (N, N) additive bias

    # Fused QKV GEMM over all rows (1/sqrt(head_dim) already folded into q cols).
    qkv = jnp.dot(x, w_attn, preferred_element_type=jnp.float32) + b_attn  # (N, 3C)

    # One head-major relayout per tensor; everything after is batched matmuls.
    def heads(t2d):  # (N, C) -> (H, N, D)
        return jnp.transpose(t2d.reshape(N, N_HEAD, HEAD_DIM), (1, 0, 2))

    q = heads(qkv[:, 0 * C:1 * C])
    k = heads(qkv[:, 1 * C:2 * C])
    v = heads(qkv[:, 2 * C:3 * C])

    # Scores + precomputed additive block-diagonal causal mask (single vadd).
    s = jnp.einsum("hnd,hmd->hnm", q, k,
                   preferred_element_type=jnp.float32)        # (H, N, N)
    s = s + mask_b[None, :, :]

    # Softmax numerator; normalize AFTER the PV matmul (half the elements).
    m = jnp.max(s, axis=-1, keepdims=True)
    p = jnp.exp(s - m)
    denom = jnp.sum(p, axis=-1, keepdims=True)                # (H, N, 1)

    y = jnp.einsum("hnm,hmd->hnd", p, v,
                   preferred_element_type=jnp.float32)        # (H, N, D)
    y = y * pl.reciprocal(denom)                              # exact (1e-4 tol)
    y = jnp.transpose(y, (1, 0, 2)).reshape(N, C)             # single relayout back

    # Output projection.
    o_ref[...] = jnp.dot(y, w_proj, preferred_element_type=jnp.float32) + b_proj


@jax.jit
def causal_self_attention(x, packed_params):
    # Flatten (B, T, C) -> (B*T, C) on the wrapper side (free metadata reshape).
    x2d = x.reshape(N, C)

    vmem = pl.BlockSpec(memory_space=pltpu.MemorySpace.VMEM)

    flops = (2 * N * C * 3 * C                       # qkv GEMM
             + 2 * 2 * N_HEAD * N * N * HEAD_DIM     # scores + weighted sum
             + 2 * N * C * C)                        # output projection
    bytes_accessed = 4 * (N * C + P_ROWS * P_COLS + N * C)

    out2d = pl.pallas_call(
        attention_kernel,
        out_shape=jax.ShapeDtypeStruct((N, C), jnp.float32),
        in_specs=[vmem, vmem],
        out_specs=vmem,
        cost_estimate=pl.CostEstimate(
            flops=flops,
            transcendentals=N_HEAD * N * N,
            bytes_accessed=bytes_accessed),
    )(x2d, packed_params)
    return out2d.reshape(B, T, C)


def init_params(key):
    ks = jax.random.split(key, 2)
    s = 0.02
    # Linear weights stored pre-transposed: y = x @ W + b  (== PyTorch x @ W.T + b).
    w_attn = s * jax.random.normal(ks[0], (C, 3 * C), jnp.float32)
    b_attn = jnp.zeros((3 * C,), jnp.float32)
    w_proj = s * jax.random.normal(ks[1], (C, C), jnp.float32)
    b_proj = jnp.zeros((C,), jnp.float32)
    return w_attn, b_attn, w_proj, b_proj


def pack_params(w_attn, b_attn, w_proj, b_proj):
    """One-time (init-time) packing of all params + static mask into one buffer."""
    buf = np.zeros((P_ROWS, P_COLS), np.float32)
    w_attn = np.array(w_attn, dtype=np.float32, copy=True)
    w_attn[:, 0:C] *= 1.0 / math.sqrt(HEAD_DIM)         # fold attention scale into q
    buf[R_WATTN:R_WATTN + C, 0:3 * C] = w_attn
    buf[R_BATTN, 0:3 * C] = np.asarray(b_attn, np.float32)
    buf[R_WPROJ:R_WPROJ + C, 0:C] = np.asarray(w_proj, np.float32)
    buf[R_BPROJ, 0:C] = np.asarray(b_proj, np.float32)
    # Additive block-diagonal causal mask over the flattened (B*T) axis.
    row = np.arange(N)[:, None]
    col = np.arange(N)[None, :]
    allowed = (row // T == col // T) & (row >= col)
    buf[R_MASK:R_MASK + N, 0:N] = np.where(allowed, 0.0, -1e30).astype(np.float32)
    return jnp.asarray(buf)


def _reference(x, w_attn, b_attn, w_proj, b_proj):
    # pure-JAX reference of CasualSelfAttention.forward (uses the ORIGINAL weights)
    qkv = x @ w_attn + b_attn
    q, k, v = jnp.split(qkv, 3, axis=-1)

    def heads(t):
        return t.reshape(B, T, N_HEAD, HEAD_DIM).transpose(0, 2, 1, 3)

    q, k, v = heads(q), heads(k), heads(v)
    s = jnp.einsum("bhqd,bhkd->bhqk", q, k) / math.sqrt(HEAD_DIM)
    causal = jnp.tril(jnp.ones((T, T), bool))
    s = jnp.where(causal, s, -jnp.inf)
    p = jax.nn.softmax(s, axis=-1)
    y = jnp.einsum("bhqk,bhkd->bhqd", p, v).transpose(0, 2, 1, 3).reshape(B, T, C)
    return y @ w_proj + b_proj


if __name__ == "__main__":
    key = jax.random.PRNGKey(0)
    kx, kp = jax.random.split(key)
    x = jax.random.normal(kx, (B, T, C), jnp.float32)
    w_attn, b_attn, w_proj, b_proj = init_params(kp)
    packed = pack_params(w_attn, b_attn, w_proj, b_proj)   # once, at init time

    out = causal_self_attention(x, packed)
    out = jax.block_until_ready(out)

    ref = _reference(x, w_attn, b_attn, w_proj, b_proj)
    assert out.shape == (B, T, C)
    assert jnp.allclose(out, ref, atol=1e-4, rtol=1e-4), (
        float(jnp.max(jnp.abs(out - ref))))
    print("KERNEL_OK")
</pallas_src>

<mosaic_0001>
module attributes {stable_mosaic.version = 11 : i64} {
  func.func @attention_kernel(%arg0: memref<16x32xf32, #tpu.memory_space<vmem>>, %arg1: memref<96x128xf32, #tpu.memory_space<vmem>>, %arg2: memref<16x32xf32, #tpu.memory_space<vmem>>) attributes {dimension_semantics = [], scalar_prefetch = 0 : i64, scratch_operands = 0 : i64, tpu.core_type = #tpu.core_type<tc>} {
    %c0 = arith.constant 0 : index
    %c0_0 = arith.constant 0 : index
    %0 = vector.load %arg0[%c0, %c0_0] : memref<16x32xf32, #tpu.memory_space<vmem>>, vector<16x32xf32>
    %c0_1 = arith.constant 0 : index
    %c0_2 = arith.constant 0 : index
    %1 = vector.load %arg1[%c0_1, %c0_2] : memref<96x128xf32, #tpu.memory_space<vmem>>, vector<32x96xf32>
    %c32 = arith.constant 32 : index
    %c0_3 = arith.constant 0 : index
    %2 = vector.load %arg1[%c32, %c0_3] : memref<96x128xf32, #tpu.memory_space<vmem>>, vector<1x96xf32>
    %c40 = arith.constant 40 : index
    %c0_4 = arith.constant 0 : index
    %3 = vector.load %arg1[%c40, %c0_4] : memref<96x128xf32, #tpu.memory_space<vmem>>, vector<32x32xf32>
    %c72 = arith.constant 72 : index
    %c0_5 = arith.constant 0 : index
    %4 = vector.load %arg1[%c72, %c0_5] : memref<96x128xf32, #tpu.memory_space<vmem>>, vector<1x32xf32>
    %c80 = arith.constant 80 : index
    %c0_6 = arith.constant 0 : index
    %5 = vector.load %arg1[%c80, %c0_6] : memref<96x128xf32, #tpu.memory_space<vmem>>, vector<16x16xf32>
    %cst = arith.constant dense<0.000000e+00> : vector<16x96xf32>
    %6 = tpu.matmul %0, %1, %cst {dimension_numbers = #tpu.dot_dimension_numbers<[1], [0], [0], [1], [0, 0, 1, 1], [], []>} : vector<16x32xf32>, vector<32x96xf32>, vector<16x96xf32> -> vector<16x96xf32>
    %7 = vector.broadcast %2 : vector<1x96xf32> to vector<16x96xf32>
    %8 = arith.addf %6, %7 : vector<16x96xf32>
    %9 = vector.extract_strided_slice %8 {offsets = [0, 0], sizes = [16, 32], strides = [1, 1]} : vector<16x96xf32> to vector<16x32xf32>
    %10 = vector.shape_cast %9 : vector<16x32xf32> to vector<16x4x8xf32>
    %11 = tpu.transpose %10, [1, 0, 2] : vector<16x4x8xf32> -> vector<4x16x8xf32>
    %12 = vector.extract_strided_slice %8 {offsets = [0, 32], sizes = [16, 32], strides = [1, 1]} : vector<16x96xf32> to vector<16x32xf32>
    %13 = vector.shape_cast %12 : vector<16x32xf32> to vector<16x4x8xf32>
    %14 = tpu.transpose %13, [1, 0, 2] : vector<16x4x8xf32> -> vector<4x16x8xf32>
    %15 = vector.extract_strided_slice %8 {offsets = [0, 64], sizes = [16, 32], strides = [1, 1]} : vector<16x96xf32> to vector<16x32xf32>
    %16 = vector.shape_cast %15 : vector<16x32xf32> to vector<16x4x8xf32>
    %17 = tpu.transpose %16, [1, 0, 2] : vector<16x4x8xf32> -> vector<4x16x8xf32>
    "tpu.trace_start"() <{level = 10 : i32, message = "hnd,hmd->hnm"}> : () -> ()
    %cst_7 = arith.constant dense<0.000000e+00> : vector<4x16x16xf32>
    %18 = tpu.matmul %11, %14, %cst_7 {dimension_numbers = #tpu.dot_dimension_numbers<[2], [2], [1], [1], [0, 0, 0, 1, 1, 1], [0], [0]>} : vector<4x16x8xf32>, vector<4x16x8xf32>, vector<4x16x16xf32> -> vector<4x16x16xf32>
    "tpu.trace_stop"() : () -> ()
    %19 = vector.shape_cast %5 : vector<16x16xf32> to vector<1x16x16xf32>
    %20 = vector.broadcast %19 : vector<1x16x16xf32> to vector<4x16x16xf32>
    %21 = arith.addf %18, %20 : vector<4x16x16xf32>
    %cst_8 = arith.constant dense<0xFF800000> : vector<4x16xf32>
    %22 = vector.multi_reduction <maximumf>, %21, %cst_8 [2] : vector<4x16x16xf32> to vector<4x16xf32>
    %23 = vector.shape_cast %22 : vector<4x16xf32> to vector<4x16x1xf32>
    %24 = vector.broadcast %23 : vector<4x16x1xf32> to vector<4x16x16xf32>
    %25 = arith.subf %21, %24 : vector<4x16x16xf32>
    %26 = math.exp %25 : vector<4x16x16xf32>
    %cst_9 = arith.constant dense<0.000000e+00> : vector<4x16xf32>
    %27 = vector.multi_reduction <add>, %26, %cst_9 [2] : vector<4x16x16xf32> to vector<4x16xf32>
    %28 = vector.shape_cast %27 : vector<4x16xf32> to vector<4x16x1xf32>
    "tpu.trace_start"() <{level = 10 : i32, message = "hnm,hmd->hnd"}> : () -> ()
    %cst_10 = arith.constant dense<0.000000e+00> : vector<4x16x8xf32>
    %29 = tpu.matmul %26, %17, %cst_10 {dimension_numbers = #tpu.dot_dimension_numbers<[2], [1], [1], [2], [0, 0, 0, 1, 1, 2], [0], [0]>} : vector<4x16x16xf32>, vector<4x16x8xf32>, vector<4x16x8xf32> -> vector<4x16x8xf32>
    "tpu.trace_stop"() : () -> ()
    %30 = tpu.reciprocal %28 : vector<4x16x1xf32> -> vector<4x16x1xf32>
    %31 = vector.broadcast %30 : vector<4x16x1xf32> to vector<4x16x8xf32>
    %32 = arith.mulf %29, %31 : vector<4x16x8xf32>
    %33 = tpu.transpose %32, [1, 0, 2] : vector<4x16x8xf32> -> vector<16x4x8xf32>
    %34 = vector.shape_cast %33 : vector<16x4x8xf32> to vector<16x32xf32>
    %cst_11 = arith.constant dense<0.000000e+00> : vector<16x32xf32>
    %35 = tpu.matmul %34, %3, %cst_11 {dimension_numbers = #tpu.dot_dimension_numbers<[1], [0], [0], [1], [0, 0, 1, 1], [], []>} : vector<16x32xf32>, vector<32x32xf32>, vector<16x32xf32> -> vector<16x32xf32>
    %36 = vector.broadcast %4 : vector<1x32xf32> to vector<16x32xf32>
    %37 = arith.addf %35, %36 : vector<16x32xf32>
    %c0_12 = arith.constant 0 : index
    %c0_13 = arith.constant 0 : index
    %38 = vector.load %arg2[%c0_12, %c0_13] : memref<16x32xf32, #tpu.memory_space<vmem>>, vector<16x32xf32>
    tpu.vector_store %arg2[%c0_12, %c0_13], %37 {strides = array<i32>} : memref<16x32xf32, #tpu.memory_space<vmem>>, vector<16x32xf32>,
    return
  }
}

</mosaic_0001>

<llo_original>
// kernel: causal_self_attention.1
$region0: #{causal_self_attention.1}
  #allocation0 [shape = 'u32[]', space=smem, size = 0x4, offset = 0x4, fixed_abs, tag = 'smem constant byte address 0x4 - core index']
  #allocation1 [shape = 'u32[72,128]{1,0:T(1,128)}', space=vmem, size = 0x9000, scoped, tag = 'internal scratch']
  %s0 = inlined_call_operand.hbm [shape: f32[16,32], index: 0, kind: input, shape index: {}]
  %s1 = inlined_call_operand.hbm [shape: f32[96,128], index: 1, kind: input, shape index: {}]
  %s2 = inlined_call_operand.hbm [shape: f32[16,32], index: 2, kind: output, shape index: {}]
  %s3 = sld [smem:[#allocation0]]
  $region26: #{causal_self_attention.1} parent=0
    _
  %s5 = ssub.s32 1, %s3
  %s6 = scalar_select 0, %s5, %s3
  $region1: #{causal_self_attention.1} parent=0
    #allocation2 [shape = 'u8[8192]{0}', space=vmem, size = 0x2000, scoped, tag = 'input window, operand 0, single buffered']
    #allocation3 [shape = 's32[1]{0}', space=sflag, size = 0x4, scoped, tag = 'scoped memory for causal_self_attention.1']
    #allocation4 [shape = 's32[1]{0}', space=sflag, size = 0x4, scoped, tag = 'scoped memory for causal_self_attention.1']
    #allocation5 [shape = 'u8[49152]{0}', space=vmem, size = 0xc000, scoped, tag = 'input window, operand 1, single buffered']
    #allocation6 [shape = 's32[1]{0}', space=sflag, size = 0x4, scoped, tag = 'scoped memory for causal_self_attention.1']
    #allocation7 [shape = 'u8[8192]{0}', space=vmem, size = 0x2000, scoped, tag = 'output window, operand 0, single buffered']
    %7 = vsyncpa [#allocation3], 0
    %8 = vsyncpa [#allocation6], 0
    %9 = vsyncpa [#allocation4], 0
    // Predicated region
    $region2: #{causal_self_attention.1} parent=1 // pred_check
      _
    $region3: #{causal_self_attention.1} parent=1 // pred_check_branch
      %11 = sbr.rel (0) target = $region5
    $region4: #{causal_self_attention.1} parent=1 // pred_region
      %13 = vsyncadd [#allocation3], 0
      %s14 = sshll.u32 %s0, 4
      %s15 = int_to_ptr.hbm [resolvable:$true] %s14
      %s16 = sshll.u32 [#allocation2], 4
      %s17 = int_to_ptr.vmem [resolvable:$true] %s16
      %22 = dma.hbm_to_vmem [thread:$0]  %s15, 256, %s17, [#allocation3], 128, 128, 8
    $region5: #{causal_self_attention.1} parent=1 // pred_fallthru
      _
    // Predicated region
    $region6: #{causal_self_attention.1} parent=1 // pred_check
      _
    $region7: #{causal_self_attention.1} parent=1 // pred_check_branch
      %24 = sbr.rel (0) target = $region9
    $region8: #{causal_self_attention.1} parent=1 // pred_region
      %26 = vsyncadd [#allocation6], 0
      %s27 = sshll.u32 %s1, 4
      %s28 = int_to_ptr.hbm [resolvable:$true] %s27
      %s29 = sshll.u32 [#allocation5], 4
      %s30 = int_to_ptr.vmem [resolvable:$true] %s29
      %35 = dma.hbm_to_vmem [thread:$0]  %s28, 1536, %s30, [#allocation6], 128, 128, 8
    $region9: #{causal_self_attention.1} parent=1 // pred_fallthru
      _
    // Predicated region
    $region10: #{causal_self_attention.1} parent=1 // pred_check
      _
    $region11: #{causal_self_attention.1} parent=1 // pred_check_branch
      %37 = sbr.rel (0) target = $region13
    $region12: #{causal_self_attention.1} parent=1 // pred_region
      %39 = dma.done [#allocation3], 256
    $region13: #{causal_self_attention.1} parent=1 // pred_fallthru
      _
    // Predicated region
    $region14: #{causal_self_attention.1} parent=1 // pred_check
      _
    $region15: #{causal_self_attention.1} parent=1 // pred_check_branch
      %41 = sbr.rel (0) target = $region17
    $region16: #{causal_self_attention.1} parent=1 // pred_region
      %43 = dma.done [#allocation6], 1536
    $region17: #{causal_self_attention.1} parent=1 // pred_fallthru
      _
    %v44 = vld [vmem:[#allocation2] sm:$0xff]
    %v45 = vld [vmem:[#allocation2 + $0x8] sm:$0xff]
    %v46 = vld [vmem:[#allocation5] sm:$0xff]
    %v47 = vld [vmem:[#allocation5 + $0x8] sm:$0xff]
    %v48 = vld [vmem:[#allocation5 + $0x10] sm:$0xff]
    %v49 = vld [vmem:[#allocation5 + $0x18] sm:$0xff]
    %v50 = vld [vmem:[#allocation5 + $0x20] sm:$0x1]
    %v51 = vld [vmem:[#allocation5 + $0x28] sm:$0xff]
    %v52 = vld [vmem:[#allocation5 + $0x30] sm:$0xff]
    %v53 = vld [vmem:[#allocation5 + $0x38] sm:$0xff]
    %v54 = vld [vmem:[#allocation5 + $0x40] sm:$0xff]
    %v55 = vld [vmem:[#allocation5 + $0x48] sm:$0x1]
    %v56 = vld [vmem:[#allocation5 + $0x50] sm:$0xff]
    %v57 = vld [vmem:[#allocation5 + $0x58] sm:$0xff]
    %v58 = vperm.slane %v50, 0
    %vm59 = vcmask 261120
    %v61 = vsel %vm59, %v44, 0
    %v64 = vsel %vm59, %v45, 0
    %66 = vmatpush.msra.mxu0 0.0
    %67 = vmatpush.msra.mxu0 0.0
    %68 = vmatpush.msra.mxu0 0.0
    %69 = vmatpush.msra.mxu0 0.0
    %70 = vmatpush.msra.mxu0 0.0
    %71 = vmatpush.msra.mxu0 0.0
    %72 = vmatpush.msra.mxu0 0.0
    %73 = vmatpush.msra.mxu0 0.0
    %74 = vmatpush.msra.mxu0 0.0
    %75 = vmatpush.msra.mxu0 0.0
    %76 = vmatpush.msra.mxu0 0.0
    %77 = vmatpush.msra.mxu0 0.0
    %78 = vmatpush.msra.mxu0 %v49
    %79 = vmatpush.msra.mxu0 %v48
    %80 = vmatpush.msra.mxu0 %v47
    %81 = vmatpush.msra.mxu0 %v46
    %82 = vmatmul.f32.gmra.mxu0 %v61
    %v83 = vpop.f32.mrf.mxu0
    %v84 = vadd.f32 %v58, %v83
    %85 = vmatmul.f32.gmra.mxu0 %v64
    %v86 = vpop.f32.mrf.mxu0
    %v87 = vadd.f32 %v58, %v86
    %88 = vdwg.mxu0
    %91 = vrot.lane.b32.xlu0 %v84, 120
    %v92 = vpop.permute.xlu0 %91
    %93 = vrot.lane.b32.xlu0 %v87, 120
    %v94 = vpop.permute.xlu0 %93
    %97 = vrot.lane.b32.xlu0 %v84, 112
    %v98 = vpop.permute.xlu0 %97
    %99 = vrot.lane.b32.xlu0 %v87, 112
    %v100 = vpop.permute.xlu0 %99
    %103 = vrot.lane.b32.xlu0 %v84, 104
    %v104 = vpop.permute.xlu0 %103
    %105 = vrot.lane.b32.xlu0 %v87, 104
    %v106 = vpop.permute.xlu0 %105
    %v109 = vrot.slane %v98, 4
    %vm110 = vcmask 1047556
    %v111 = vsel %vm110, %v109, %v84
    %v112 = vrot.slane %v84, 4
    %v113 = vsel %vm110, %v98, %v112
    %v115 = vunpack.c.l.s4 1983009808
    %v116 = vunpack.c.0.s8 %v115
    %v117 = vperm.slane %v111, %v116
    %v119 = vunpack.c.l.s4 1983009808
    %v120 = vunpack.c.0.s8 %v119
    %v121 = vperm.slane %v113, %v120
    %v122 = vrot.slane %v104, 4
    %v123 = vsel %vm110, %v122, %v92
    %v124 = vrot.slane %v92, 4
    %v125 = vsel %vm110, %v104, %v124
    %v127 = vunpack.c.l.s4 1983009808
    %v128 = vunpack.c.0.s8 %v127
    %v129 = vperm.slane %v123, %v128
    %v131 = vunpack.c.l.s4 1983009808
    %v132 = vunpack.c.0.s8 %v131
    %v133 = vperm.slane %v125, %v132
    %v134 = vrot.slane %v129, 4
    %v135 = vsel %vm110, %v134, %v117
    %v136 = vrot.slane %v117, 4
    %v137 = vsel %vm110, %v129, %v136
    %v139 = vunpack.c.l.s4 1934713408
    %v140 = vunpack.c.0.s8 %v139
    %v141 = vperm.slane %v135, %v140
    %v143 = vunpack.c.l.s4 1934713408
    %v144 = vunpack.c.0.s8 %v143
    %v145 = vperm.slane %v137, %v144
    %v146 = vrot.slane %v133, 4
    %v147 = vsel %vm110, %v146, %v121
    %v148 = vrot.slane %v121, 4
    %v149 = vsel %vm110, %v133, %v148
    %v151 = vunpack.c.l.s4 1934713408
    %v152 = vunpack.c.0.s8 %v151
    %v153 = vperm.slane %v147, %v152
    %v155 = vunpack.c.l.s4 1934713408
    %v156 = vunpack.c.0.s8 %v155
    %v157 = vperm.slane %v149, %v156
    %v158 = vrot.slane %v141, 4
    %v159 = vsel %vm110, 0.0, %v158
    %v160 = vrot.slane %v145, 4
    %v161 = vsel %vm110, 0.0, %v160
    %v162 = vrot.slane %v153, 4
    %v163 = vsel %vm110, 0.0, %v162
    %v164 = vrot.slane %v157, 4
    %v165 = vsel %vm110, 0.0, %v164
    %v166 = vrot.slane %v100, 4
    %v167 = vsel %vm110, %v166, %v87
    %v168 = vrot.slane %v87, 4
    %v169 = vsel %vm110, %v100, %v168
    %v171 = vunpack.c.l.s4 1983009808
    %v172 = vunpack.c.0.s8 %v171
    %v173 = vperm.slane %v167, %v172
    %v175 = vunpack.c.l.s4 1983009808
    %v176 = vunpack.c.0.s8 %v175
    %v177 = vperm.slane %v169, %v176
    %v178 = vrot.slane %v106, 4
    %v179 = vsel %vm110, %v178, %v94
    %v180 = vrot.slane %v94, 4
    %v181 = vsel %vm110, %v106, %v180
    %v183 = vunpack.c.l.s4 1983009808
    %v184 = vunpack.c.0.s8 %v183
    %v185 = vperm.slane %v179, %v184
    %v187 = vunpack.c.l.s4 1983009808
    %v188 = vunpack.c.0.s8 %v187
    %v189 = vperm.slane %v181, %v188
    %v190 = vrot.slane %v185, 4
    %v191 = vsel %vm110, %v190, %v173
    %v192 = vrot.slane %v173, 4
    %v193 = vsel %vm110, %v185, %v192
    %v195 = vunpack.c.l.s4 1934713408
    %v196 = vunpack.c.0.s8 %v195
    %v197 = vperm.slane %v191, %v196
    %v199 = vunpack.c.l.s4 1934713408
    %v200 = vunpack.c.0.s8 %v199
    %v201 = vperm.slane %v193, %v200
    %v202 = vrot.slane %v189, 4
    %v203 = vsel %vm110, %v202, %v177
    %v204 = vrot.slane %v177, 4
    %v205 = vsel %vm110, %v189, %v204
    %v207 = vunpack.c.l.s4 1934713408
    %v208 = vunpack.c.0.s8 %v207
    %v209 = vperm.slane %v203, %v208
    %v211 = vunpack.c.l.s4 1934713408
    %v212 = vunpack.c.0.s8 %v211
    %v213 = vperm.slane %v205, %v212
    %v214 = vrot.slane %v197, 4
    %v215 = vsel %vm110, 0.0, %v214
    %v216 = vrot.slane %v201, 4
    %v217 = vsel %vm110, 0.0, %v216
    %v218 = vrot.slane %v209, 4
    %v219 = vsel %vm110, 0.0, %v218
    %v220 = vrot.slane %v213, 4
    %v221 = vsel %vm110, 0.0, %v220
    %v222 = vsel %vm110, %v160, %v141
    %v224 = vunpack.c.l.s4 1983009808
    %v225 = vunpack.c.0.s8 %v224
    %v226 = vperm.slane %v222, %v225
    %v227 = vrot.slane %v161, 4
    %v228 = vsel %vm110, %v227, %v159
    %v230 = vunpack.c.l.s4 1983009808
    %v231 = vunpack.c.0.s8 %v230
    %v232 = vperm.slane %v228, %v231
    %v233 = vsel %vm110, %v164, %v153
    %v235 = vunpack.c.l.s4 1983009808
    %v236 = vunpack.c.0.s8 %v235
    %v237 = vperm.slane %v233, %v236
    %v238 = vrot.slane %v165, 4
    %v239 = vsel %vm110, %v238, %v163
    %v241 = vunpack.c.l.s4 1983009808
    %v242 = vunpack.c.0.s8 %v241
    %v243 = vperm.slane %v239, %v242
    %v244 = vrot.slane %v232, 4
    %v245 = vsel %vm110, %v244, %v226
    %v246 = vrot.slane %v226, 4
    %v247 = vsel %vm110, %v232, %v246
    %v249 = vunpack.c.l.s4 1934713408
    %v250 = vunpack.c.0.s8 %v249
    %v251 = vperm.slane %v245, %v250
    %v253 = vunpack.c.l.s4 1934713408
    %v254 = vunpack.c.0.s8 %v253
    %v255 = vperm.slane %v247, %v254
    %v256 = vrot.slane %v243, 4
    %v257 = vsel %vm110, %v256, %v237
    %v258 = vrot.slane %v237, 4
    %v259 = vsel %vm110, %v243, %v258
    %v261 = vunpack.c.l.s4 1934713408
    %v262 = vunpack.c.0.s8 %v261
    %v263 = vperm.slane %v257, %v262
    %v265 = vunpack.c.l.s4 1934713408
    %v266 = vunpack.c.0.s8 %v265
    %v267 = vperm.slane %v259, %v266
    %v268 = vrot.slane %v263, 4
    %v269 = vsel %vm110, %v268, %v251
    %v270 = vrot.slane %v251, 4
    %v271 = vsel %vm110, %v263, %v270
    %v272 = vrot.slane %v267, 4
    %v273 = vsel %vm110, %v272, %v255
    %v274 = vrot.slane %v255, 4
    %v275 = vsel %vm110, %v267, %v274
    %v276 = vsel %vm110, %v216, %v197
    %v278 = vunpack.c.l.s4 1983009808
    %v279 = vunpack.c.0.s8 %v278
    %v280 = vperm.slane %v276, %v279
    %v281 = vrot.slane %v217, 4
    %v282 = vsel %vm110, %v281, %v215
    %v284 = vunpack.c.l.s4 1983009808
    %v285 = vunpack.c.0.s8 %v284
    %v286 = vperm.slane %v282, %v285
    %v287 = vsel %vm110, %v220, %v209
    %v289 = vunpack.c.l.s4 1983009808
    %v290 = vunpack.c.0.s8 %v289
    %v291 = vperm.slane %v287, %v290
    %v292 = vrot.slane %v221, 4
    %v293 = vsel %vm110, %v292, %v219
    %v295 = vunpack.c.l.s4 1983009808
    %v296 = vunpack.c.0.s8 %v295
    %v297 = vperm.slane %v293, %v296
    %v298 = vrot.slane %v286, 4
    %v299 = vsel %vm110, %v298, %v280
    %v300 = vrot.slane %v280, 4
    %v301 = vsel %vm110, %v286, %v300
    %v303 = vunpack.c.l.s4 1934713408
    %v304 = vunpack.c.0.s8 %v303
    %v305 = vperm.slane %v299, %v304
    %v307 = vunpack.c.l.s4 1934713408
    %v308 = vunpack.c.0.s8 %v307
    %v309 = vperm.slane %v301, %v308
    %v310 = vrot.slane %v297, 4
    %v311 = vsel %vm110, %v310, %v291
    %v312 = vrot.slane %v291, 4
    %v313 = vsel %vm110, %v297, %v312
    %v315 = vunpack.c.l.s4 1934713408
    %v316 = vunpack.c.0.s8 %v315
    %v317 = vperm.slane %v311, %v316
    %v319 = vunpack.c.l.s4 1934713408
    %v320 = vunpack.c.0.s8 %v319
    %v321 = vperm.slane %v313, %v320
    %v322 = vrot.slane %v317, 4
    %v323 = vsel %vm110, %v322, %v305
    %v324 = vrot.slane %v305, 4
    %v325 = vsel %vm110, %v317, %v324
    %v326 = vrot.slane %v321, 4
    %v327 = vsel %vm110, %v326, %v309
    %v328 = vrot.slane %v309, 4
    %v329 = vsel %vm110, %v321, %v328
    %330 = vrot.lane.b32.xlu0 %v84, 96
    %v331 = vpop.permute.xlu0 %330
    %332 = vrot.lane.b32.xlu0 %v87, 96
    %v333 = vpop.permute.xlu0 %332
    %334 = vrot.lane.b32.xlu0 %v92, 96
    %v335 = vpop.permute.xlu0 %334
    %336 = vrot.lane.b32.xlu0 %v94, 96
    %v337 = vpop.permute.xlu0 %336
    %338 = vrot.lane.b32.xlu0 %v98, 96
    %v339 = vpop.permute.xlu0 %338
    %340 = vrot.lane.b32.xlu0 %v100, 96
    %v341 = vpop.permute.xlu0 %340
    %342 = vrot.lane.b32.xlu0 %v104, 96
    %v343 = vpop.permute.xlu0 %342
    %344 = vrot.lane.b32.xlu0 %v106, 96
    %v345 = vpop.permute.xlu0 %344
    %v354 = vrot.slane %v339, 4
    %v355 = vsel %vm110, %v354, %v331
    %v356 = vrot.slane %v331, 4
    %v357 = vsel %vm110, %v339, %v356
    %v359 = vunpack.c.l.s4 1983009808
    %v360 = vunpack.c.0.s8 %v359
    %v361 = vperm.slane %v355, %v360
    %v363 = vunpack.c.l.s4 1983009808
    %v364 = vunpack.c.0.s8 %v363
    %v365 = vperm.slane %v357, %v364
    %v366 = vrot.slane %v343, 4
    %v367 = vsel %vm110, %v366, %v335
    %v368 = vrot.slane %v335, 4
    %v369 = vsel %vm110, %v343, %v368
    %v371 = vunpack.c.l.s4 1983009808
    %v372 = vunpack.c.0.s8 %v371
    %v373 = vperm.slane %v367, %v372
    %v375 = vunpack.c.l.s4 1983009808
    %v376 = vunpack.c.0.s8 %v375
    %v377 = vperm.slane %v369, %v376
    %v378 = vrot.slane %v373, 4
    %v379 = vsel %vm110, %v378, %v361
    %v380 = vrot.slane %v361, 4
    %v381 = vsel %vm110, %v373, %v380
    %v383 = vunpack.c.l.s4 1934713408
    %v384 = vunpack.c.0.s8 %v383
    %v385 = vperm.slane %v379, %v384
    %v387 = vunpack.c.l.s4 1934713408
    %v388 = vunpack.c.0.s8 %v387
    %v389 = vperm.slane %v381, %v388
    %v390 = vrot.slane %v377, 4
    %v391 = vsel %vm110, %v390, %v365
    %v392 = vrot.slane %v365, 4
    %v393 = vsel %vm110, %v377, %v392
    %v395 = vunpack.c.l.s4 1934713408
    %v396 = vunpack.c.0.s8 %v395
    %v397 = vperm.slane %v391, %v396
    %v399 = vunpack.c.l.s4 1934713408
    %v400 = vunpack.c.0.s8 %v399
    %v401 = vperm.slane %v393, %v400
    %v402 = vrot.slane %v385, 4
    %v403 = vsel %vm110, 0.0, %v402
    %v404 = vrot.slane %v389, 4
    %v405 = vsel %vm110, 0.0, %v404
    %v406 = vrot.slane %v397, 4
    %v407 = vsel %vm110, 0.0, %v406
    %v408 = vrot.slane %v401, 4
    %v409 = vsel %vm110, 0.0, %v408
    %v410 = vrot.slane %v341, 4
    %v411 = vsel %vm110, %v410, %v333
    %v412 = vrot.slane %v333, 4
    %v413 = vsel %vm110, %v341, %v412
    %v415 = vunpack.c.l.s4 1983009808
    %v416 = vunpack.c.0.s8 %v415
    %v417 = vperm.slane %v411, %v416
    %v419 = vunpack.c.l.s4 1983009808
    %v420 = vunpack.c.0.s8 %v419
    %v421 = vperm.slane %v413, %v420
    %v422 = vrot.slane %v345, 4
    %v423 = vsel %vm110, %v422, %v337
    %v424 = vrot.slane %v337, 4
    %v425 = vsel %vm110, %v345, %v424
    %v427 = vunpack.c.l.s4 1983009808
    %v428 = vunpack.c.0.s8 %v427
    %v429 = vperm.slane %v423, %v428
    %v431 = vunpack.c.l.s4 1983009808
    %v432 = vunpack.c.0.s8 %v431
    %v433 = vperm.slane %v425, %v432
    %v434 = vrot.slane %v429, 4
    %v435 = vsel %vm110, %v434, %v417
    %v436 = vrot.slane %v417, 4
    %v437 = vsel %vm110, %v429, %v436
    %v439 = vunpack.c.l.s4 1934713408
    %v440 = vunpack.c.0.s8 %v439
    %v441 = vperm.slane %v435, %v440
    %v443 = vunpack.c.l.s4 1934713408
    %v444 = vunpack.c.0.s8 %v443
    %v445 = vperm.slane %v437, %v444
    %v446 = vrot.slane %v433, 4
    %v447 = vsel %vm110, %v446, %v421
    %v448 = vrot.slane %v421, 4
    %v449 = vsel %vm110, %v433, %v448
    %v451 = vunpack.c.l.s4 1934713408
    %v452 = vunpack.c.0.s8 %v451
    %v453 = vperm.slane %v447, %v452
    %v455 = vunpack.c.l.s4 1934713408
    %v456 = vunpack.c.0.s8 %v455
    %v457 = vperm.slane %v449, %v456
    %v458 = vrot.slane %v441, 4
    %v459 = vsel %vm110, 0.0, %v458
    %v460 = vrot.slane %v445, 4
    %v461 = vsel %vm110, 0.0, %v460
    %v462 = vrot.slane %v453, 4
    %v463 = vsel %vm110, 0.0, %v462
    %v464 = vrot.slane %v457, 4
    %v465 = vsel %vm110, 0.0, %v464
    %v466 = vsel %vm110, %v404, %v385
    %v468 = vunpack.c.l.s4 1983009808
    %v469 = vunpack.c.0.s8 %v468
    %v470 = vperm.slane %v466, %v469
    %v471 = vrot.slane %v405, 4
    %v472 = vsel %vm110, %v471, %v403
    %v474 = vunpack.c.l.s4 1983009808
    %v475 = vunpack.c.0.s8 %v474
    %v476 = vperm.slane %v472, %v475
    %v477 = vsel %vm110, %v408, %v397
    %v479 = vunpack.c.l.s4 1983009808
    %v480 = vunpack.c.0.s8 %v479
    %v481 = vperm.slane %v477, %v480
    %v482 = vrot.slane %v409, 4
    %v483 = vsel %vm110, %v482, %v407
    %v485 = vunpack.c.l.s4 1983009808
    %v486 = vunpack.c.0.s8 %v485
    %v487 = vperm.slane %v483, %v486
    %v488 = vrot.slane %v476, 4
    %v489 = vsel %vm110, %v488, %v470
    %v490 = vrot.slane %v470, 4
    %v491 = vsel %vm110, %v476, %v490
    %v493 = vunpack.c.l.s4 1934713408
    %v494 = vunpack.c.0.s8 %v493
    %v495 = vperm.slane %v489, %v494
    %v497 = vunpack.c.l.s4 1934713408
    %v498 = vunpack.c.0.s8 %v497
    %v499 = vperm.slane %v491, %v498
    %v500 = vrot.slane %v487, 4
    %v501 = vsel %vm110, %v500, %v481
    %v502 = vrot.slane %v481, 4
    %v503 = vsel %vm110, %v487, %v502
    %v505 = vunpack.c.l.s4 1934713408
    %v506 = vunpack.c.0.s8 %v505
    %v507 = vperm.slane %v501, %v506
    %v509 = vunpack.c.l.s4 1934713408
    %v510 = vunpack.c.0.s8 %v509
    %v511 = vperm.slane %v503, %v510
    %v512 = vrot.slane %v507, 4
    %v513 = vsel %vm110, %v512, %v495
    %v514 = vrot.slane %v495, 4
    %v515 = vsel %vm110, %v507, %v514
    %v516 = vrot.slane %v511, 4
    %v517 = vsel %vm110, %v516, %v499
    %v518 = vrot.slane %v499, 4
    %v519 = vsel %vm110, %v511, %v518
    %v520 = vsel %vm110, %v460, %v441
    %v522 = vunpack.c.l.s4 1983009808
    %v523 = vunpack.c.0.s8 %v522
    %v524 = vperm.slane %v520, %v523
    %v525 = vrot.slane %v461, 4
    %v526 = vsel %vm110, %v525, %v459
    %v528 = vunpack.c.l.s4 1983009808
    %v529 = vunpack.c.0.s8 %v528
    %v530 = vperm.slane %v526, %v529
    %v531 = vsel %vm110, %v464, %v453
    %v533 = vunpack.c.l.s4 1983009808
    %v534 = vunpack.c.0.s8 %v533
    %v535 = vperm.slane %v531, %v534
    %v536 = vrot.slane %v465, 4
    %v537 = vsel %vm110, %v536, %v463
    %v539 = vunpack.c.l.s4 1983009808
    %v540 = vunpack.c.0.s8 %v539
    %v541 = vperm.slane %v537, %v540
    %v542 = vrot.slane %v530, 4
    %v543 = vsel %vm110, %v542, %v524
    %v544 = vrot.slane %v524, 4
    %v545 = vsel %vm110, %v530, %v544
    %v547 = vunpack.c.l.s4 1934713408
    %v548 = vunpack.c.0.s8 %v547
    %v549 = vperm.slane %v543, %v548
    %v551 = vunpack.c.l.s4 1934713408
    %v552 = vunpack.c.0.s8 %v551
    %v553 = vperm.slane %v545, %v552
    %v554 = vrot.slane %v541, 4
    %v555 = vsel %vm110, %v554, %v535
    %v556 = vrot.slane %v535, 4
    %v557 = vsel %vm110, %v541, %v556
    %v559 = vunpack.c.l.s4 1934713408
    %v560 = vunpack.c.0.s8 %v559
    %v561 = vperm.slane %v555, %v560
    %v563 = vunpack.c.l.s4 1934713408
    %v564 = vunpack.c.0.s8 %v563
    %v565 = vperm.slane %v557, %v564
    %v566 = vrot.slane %v561, 4
    %v567 = vsel %vm110, %v566, %v549
    %v568 = vrot.slane %v549, 4
    %v569 = vsel %vm110, %v561, %v568
    %v570 = vrot.slane %v565, 4
    %v571 = vsel %vm110, %v570, %v553
    %v572 = vrot.slane %v553, 4
    %v573 = vsel %vm110, %v565, %v572
    %574 = vrot.lane.b32.xlu0 %v84, 64
    %v575 = vpop.permute.xlu0 %574
    %576 = vrot.lane.b32.xlu0 %v87, 64
    %v577 = vpop.permute.xlu0 %576
    %578 = vrot.lane.b32.xlu0 %v92, 64
    %v579 = vpop.permute.xlu0 %578
    %580 = vrot.lane.b32.xlu0 %v94, 64
    %v581 = vpop.permute.xlu0 %580
    %582 = vrot.lane.b32.xlu0 %v98, 64
    %v583 = vpop.permute.xlu0 %582
    %584 = vrot.lane.b32.xlu0 %v100, 64
    %v585 = vpop.permute.xlu0 %584
    %586 = vrot.lane.b32.xlu0 %v104, 64
    %v587 = vpop.permute.xlu0 %586
    %588 = vrot.lane.b32.xlu0 %v106, 64
    %v589 = vpop.permute.xlu0 %588
    %v598 = vrot.slane %v583, 4
    %v599 = vsel %vm110, %v598, %v575
    %v600 = vrot.slane %v575, 4
    %v601 = vsel %vm110, %v583, %v600
    %v603 = vunpack.c.l.s4 1983009808
    %v604 = vunpack.c.0.s8 %v603
    %v605 = vperm.slane %v599, %v604
    %v607 = vunpack.c.l.s4 1983009808
    %v608 = vunpack.c.0.s8 %v607
    %v609 = vperm.slane %v601, %v608
    %v610 = vrot.slane %v587, 4
    %v611 = vsel %vm110, %v610, %v579
    %v612 = vrot.slane %v579, 4
    %v613 = vsel %vm110, %v587, %v612
    %v615 = vunpack.c.l.s4 1983009808
    %v616 = vunpack.c.0.s8 %v615
    %v617 = vperm.slane %v611, %v616
    %v619 = vunpack.c.l.s4 1983009808
    %v620 = vunpack.c.0.s8 %v619
    %v621 = vperm.slane %v613, %v620
    %v622 = vrot.slane %v617, 4
    %v623 = vsel %vm110, %v622, %v605
    %v624 = vrot.slane %v605, 4
    %v625 = vsel %vm110, %v617, %v624
    %v627 = vunpack.c.l.s4 1934713408
    %v628 = vunpack.c.0.s8 %v627
    %v629 = vperm.slane %v623, %v628
    %v631 = vunpack.c.l.s4 1934713408
    %v632 = vunpack.c.0.s8 %v631
    %v633 = vperm.slane %v625, %v632
    %v634 = vrot.slane %v621, 4
    %v635 = vsel %vm110, %v634, %v609
    %v636 = vrot.slane %v609, 4
    %v637 = vsel %vm110, %v621, %v636
    %v639 = vunpack.c.l.s4 1934713408
    %v640 = vunpack.c.0.s8 %v639
    %v641 = vperm.slane %v635, %v640
    %v643 = vunpack.c.l.s4 1934713408
    %v644 = vunpack.c.0.s8 %v643
    %v645 = vperm.slane %v637, %v644
    %v646 = vrot.slane %v629, 4
    %v647 = vsel %vm110, 0.0, %v646
    %v648 = vrot.slane %v633, 4
    %v649 = vsel %vm110, 0.0, %v648
    %v650 = vrot.slane %v641, 4
    %v651 = vsel %vm110, 0.0, %v650
    %v652 = vrot.slane %v645, 4
    %v653 = vsel %vm110, 0.0, %v652
    %v654 = vrot.slane %v585, 4
    %v655 = vsel %vm110, %v654, %v577
    %v656 = vrot.slane %v577, 4
    %v657 = vsel %vm110, %v585, %v656
    %v659 = vunpack.c.l.s4 1983009808
    %v660 = vunpack.c.0.s8 %v659
    %v661 = vperm.slane %v655, %v660
    %v663 = vunpack.c.l.s4 1983009808
    %v664 = vunpack.c.0.s8 %v663
    %v665 = vperm.slane %v657, %v664
    %v666 = vrot.slane %v589, 4
    %v667 = vsel %vm110, %v666, %v581
    %v668 = vrot.slane %v581, 4
    %v669 = vsel %vm110, %v589, %v668
    %v671 = vunpack.c.l.s4 1983009808
    %v672 = vunpack.c.0.s8 %v671
    %v673 = vperm.slane %v667, %v672
    %v675 = vunpack.c.l.s4 1983009808
    %v676 = vunpack.c.0.s8 %v675
    %v677 = vperm.slane %v669, %v676
    %v678 = vrot.slane %v673, 4
    %v679 = vsel %vm110, %v678, %v661
    %v680 = vrot.slane %v661, 4
    %v681 = vsel %vm110, %v673, %v680
    %v683 = vunpack.c.l.s4 1934713408
    %v684 = vunpack.c.0.s8 %v683
    %v685 = vperm.slane %v679, %v684
    %v687 = vunpack.c.l.s4 1934713408
    %v688 = vunpack.c.0.s8 %v687
    %v689 = vperm.slane %v681, %v688
    %v690 = vrot.slane %v677, 4
    %v691 = vsel %vm110, %v690, %v665
    %v692 = vrot.slane %v665, 4
    %v693 = vsel %vm110, %v677, %v692
    %v695 = vunpack.c.l.s4 1934713408
    %v696 = vunpack.c.0.s8 %v695
    %v697 = vperm.slane %v691, %v696
    %v699 = vunpack.c.l.s4 1934713408
    %v700 = vunpack.c.0.s8 %v699
    %v701 = vperm.slane %v693, %v700
    %v702 = vrot.slane %v685, 4
    %v703 = vsel %vm110, 0.0, %v702
    %v704 = vrot.slane %v689, 4
    %v705 = vsel %vm110, 0.0, %v704
    %v706 = vrot.slane %v697, 4
    %v707 = vsel %vm110, 0.0, %v706
    %v708 = vrot.slane %v701, 4
    %v709 = vsel %vm110, 0.0, %v708
    %v710 = vsel %vm110, %v648, %v629
    %v712 = vunpack.c.l.s4 1983009808
    %v713 = vunpack.c.0.s8 %v712
    %v714 = vperm.slane %v710, %v713
    %v715 = vrot.slane %v649, 4
    %v716 = vsel %vm110, %v715, %v647
    %v718 = vunpack.c.l.s4 1983009808
    %v719 = vunpack.c.0.s8 %v718
    %v720 = vperm.slane %v716, %v719
    %v721 = vsel %vm110, %v652, %v641
    %v723 = vunpack.c.l.s4 1983009808
    %v724 = vunpack.c.0.s8 %v723
    %v725 = vperm.slane %v721, %v724
    %v726 = vrot.slane %v653, 4
    %v727 = vsel %vm110, %v726, %v651
    %v729 = vunpack.c.l.s4 1983009808
    %v730 = vunpack.c.0.s8 %v729
    %v731 = vperm.slane %v727, %v730
    %v732 = vrot.slane %v720, 4
    %v733 = vsel %vm110, %v732, %v714
    %v734 = vrot.slane %v714, 4
    %v735 = vsel %vm110, %v720, %v734
    %v737 = vunpack.c.l.s4 1934713408
    %v738 = vunpack.c.0.s8 %v737
    %v739 = vperm.slane %v733, %v738
    %v741 = vunpack.c.l.s4 1934713408
    %v742 = vunpack.c.0.s8 %v741
    %v743 = vperm.slane %v735, %v742
    %v744 = vrot.slane %v731, 4
    %v745 = vsel %vm110, %v744, %v725
    %v746 = vrot.slane %v725, 4
    %v747 = vsel %vm110, %v731, %v746
    %v749 = vunpack.c.l.s4 1934713408
    %v750 = vunpack.c.0.s8 %v749
    %v751 = vperm.slane %v745, %v750
    %v753 = vunpack.c.l.s4 1934713408
    %v754 = vunpack.c.0.s8 %v753
    %v755 = vperm.slane %v747, %v754
    %v756 = vrot.slane %v751, 4
    %v757 = vsel %vm110, %v756, %v739
    %v758 = vrot.slane %v739, 4
    %v759 = vsel %vm110, %v751, %v758
    %v760 = vrot.slane %v755, 4
    %v761 = vsel %vm110, %v760, %v743
    %v762 = vrot.slane %v743, 4
    %v763 = vsel %vm110, %v755, %v762
    %v764 = vsel %vm110, %v704, %v685
    %v766 = vunpack.c.l.s4 1983009808
    %v767 = vunpack.c.0.s8 %v766
    %v768 = vperm.slane %v764, %v767
    %v769 = vrot.slane %v705, 4
    %v770 = vsel %vm110, %v769, %v703
    %v772 = vunpack.c.l.s4 1983009808
    %v773 = vunpack.c.0.s8 %v772
    %v774 = vperm.slane %v770, %v773
    %v775 = vsel %vm110, %v708, %v697
    %v777 = vunpack.c.l.s4 1983009808
    %v778 = vunpack.c.0.s8 %v777
    %v779 = vperm.slane %v775, %v778
    %v780 = vrot.slane %v709, 4
    %v781 = vsel %vm110, %v780, %v707
    %v783 = vunpack.c.l.s4 1983009808
    %v784 = vunpack.c.0.s8 %v783
    %v785 = vperm.slane %v781, %v784
    %v786 = vrot.slane %v774, 4
    %v787 = vsel %vm110, %v786, %v768
    %v788 = vrot.slane %v768, 4
    %v789 = vsel %vm110, %v774, %v788
    %v791 = vunpack.c.l.s4 1934713408
    %v792 = vunpack.c.0.s8 %v791
    %v793 = vperm.slane %v787, %v792
    %v795 = vunpack.c.l.s4 1934713408
    %v796 = vunpack.c.0.s8 %v795
    %v797 = vperm.slane %v789, %v796
    %v798 = vrot.slane %v785, 4
    %v799 = vsel %vm110, %v798, %v779
    %v800 = vrot.slane %v779, 4
    %v801 = vsel %vm110, %v785, %v800
    %v803 = vunpack.c.l.s4 1934713408
    %v804 = vunpack.c.0.s8 %v803
    %v805 = vperm.slane %v799, %v804
    %v807 = vunpack.c.l.s4 1934713408
    %v808 = vunpack.c.0.s8 %v807
    %v809 = vperm.slane %v801, %v808
    %v810 = vrot.slane %v805, 4
    %v811 = vsel %vm110, %v810, %v793
    %v812 = vrot.slane %v793, 4
    %v813 = vsel %vm110, %v805, %v812
    %v814 = vrot.slane %v809, 4
    %v815 = vsel %vm110, %v814, %v797
    %v816 = vrot.slane %v797, 4
    %v817 = vsel %vm110, %v809, %v816
    %vm818 = vcmask 64512
    %v820 = vsel %vm818, %v269, 0
    %v823 = vsel %vm818, %v323, 0
    %v826 = vsel %vm818, %v513, 0
    %v829 = vsel %vm818, %v567, 0
    %831 = vmatpush.xpose.msra.mxu0 0.0
    %832 = vmatpush.xpose.msra.mxu0 0.0
    %833 = vmatpush.xpose.msra.mxu0 0.0
    %834 = vmatpush.xpose.msra.mxu0 0.0
    %835 = vmatpush.xpose.msra.mxu0 0.0
    %836 = vmatpush.xpose.msra.mxu0 0.0
    %837 = vmatpush.xpose.msra.mxu0 0.0
    %838 = vmatpush.xpose.msra.mxu0 0.0
    %839 = vmatpush.xpose.msra.mxu0 0.0
    %840 = vmatpush.xpose.msra.mxu0 0.0
    %841 = vmatpush.xpose.msra.mxu0 0.0
    %842 = vmatpush.xpose.msra.mxu0 0.0
    %843 = vmatpush.xpose.msra.mxu0 0.0
    %844 = vmatpush.xpose.msra.mxu0 0.0
    %845 = vmatpush.xpose.msra.mxu0 %v829
    %846 = vmatpush.xpose.msra.mxu0 %v826
    %847 = vmatmul.f32.gmra.mxu0 %v820
    %v848 = vpop.f32.mrf.mxu0
    %v849 = vadd.f32 %v56, %v848
    %850 = vmatmul.f32.gmra.mxu0 %v823
    %v851 = vpop.f32.mrf.mxu0
    %v852 = vadd.f32 %v57, %v851
    %853 = vdwg.mxu0
    %v855 = vsel %vm818, %v271, 0
    %v858 = vsel %vm818, %v325, 0
    %v861 = vsel %vm818, %v515, 0
    %v864 = vsel %vm818, %v569, 0
    %866 = vmatpush.xpose.msra.mxu0 0.0
    %867 = vmatpush.xpose.msra.mxu0 0.0
    %868 = vmatpush.xpose.msra.mxu0 0.0
    %869 = vmatpush.xpose.msra.mxu0 0.0
    %870 = vmatpush.xpose.msra.mxu0 0.0
    %871 = vmatpush.xpose.msra.mxu0 0.0
    %872 = vmatpush.xpose.msra.mxu0 0.0
    %873 = vmatpush.xpose.msra.mxu0 0.0
    %874 = vmatpush.xpose.msra.mxu0 0.0
    %875 = vmatpush.xpose.msra.mxu0 0.0
    %876 = vmatpush.xpose.msra.mxu0 0.0
    %877 = vmatpush.xpose.msra.mxu0 0.0
    %878 = vmatpush.xpose.msra.mxu0 0.0
    %879 = vmatpush.xpose.msra.mxu0 0.0
    %880 = vmatpush.xpose.msra.mxu0 %v864
    %881 = vmatpush.xpose.msra.mxu0 %v861
    %882 = vmatmul.f32.gmra.mxu0 %v855
    %v883 = vpop.f32.mrf.mxu0
    %v884 = vadd.f32 %v56, %v883
    %885 = vmatmul.f32.gmra.mxu0 %v858
    %v886 = vpop.f32.mrf.mxu0
    %v887 = vadd.f32 %v57, %v886
    %888 = vdwg.mxu0
    %v890 = vsel %vm818, %v273, 0
    %v893 = vsel %vm818, %v327, 0
    %v896 = vsel %vm818, %v517, 0
    %v899 = vsel %vm818, %v571, 0
    %901 = vmatpush.xpose.msra.mxu0 0.0
    %902 = vmatpush.xpose.msra.mxu0 0.0
    %903 = vmatpush.xpose.msra.mxu0 0.0
    %904 = vmatpush.xpose.msra.mxu0 0.0
    %905 = vmatpush.xpose.msra.mxu0 0.0
    %906 = vmatpush.xpose.msra.mxu0 0.0
    %907 = vmatpush.xpose.msra.mxu0 0.0
    %908 = vmatpush.xpose.msra.mxu0 0.0
    %909 = vmatpush.xpose.msra.mxu0 0.0
    %910 = vmatpush.xpose.msra.mxu0 0.0
    %911 = vmatpush.xpose.msra.mxu0 0.0
    %912 = vmatpush.xpose.msra.mxu0 0.0
    %913 = vmatpush.xpose.msra.mxu0 0.0
    %914 = vmatpush.xpose.msra.mxu0 0.0
    %915 = vmatpush.xpose.msra.mxu0 %v899
    %916 = vmatpush.xpose.msra.mxu0 %v896
    %917 = vmatmul.f32.gmra.mxu0 %v890
    %v918 = vpop.f32.mrf.mxu0
    %v919 = vadd.f32 %v56, %v918
    %920 = vmatmul.f32.gmra.mxu0 %v893
    %v921 = vpop.f32.mrf.mxu0
    %v922 = vadd.f32 %v57, %v921
    %923 = vdwg.mxu0
    %v925 = vsel %vm818, %v275, 0
    %v928 = vsel %vm818, %v329, 0
    %v931 = vsel %vm818, %v519, 0
    %v934 = vsel %vm818, %v573, 0
    %936 = vmatpush.xpose.msra.mxu0 0.0
    %937 = vmatpush.xpose.msra.mxu0 0.0
    %938 = vmatpush.xpose.msra.mxu0 0.0
    %939 = vmatpush.xpose.msra.mxu0 0.0
    %940 = vmatpush.xpose.msra.mxu0 0.0
    %941 = vmatpush.xpose.msra.mxu0 0.0
    %942 = vmatpush.xpose.msra.mxu0 0.0
    %943 = vmatpush.xpose.msra.mxu0 0.0
    %944 = vmatpush.xpose.msra.mxu0 0.0
    %945 = vmatpush.xpose.msra.mxu0 0.0
    %946 = vmatpush.xpose.msra.mxu0 0.0
    %947 = vmatpush.xpose.msra.mxu0 0.0
    %948 = vmatpush.xpose.msra.mxu0 0.0
    %949 = vmatpush.xpose.msra.mxu0 0.0
    %950 = vmatpush.xpose.msra.mxu0 %v934
    %951 = vmatpush.xpose.msra.mxu0 %v931
    %952 = vmatmul.f32.gmra.mxu0 %v925
    %v953 = vpop.f32.mrf.mxu0
    %v954 = vadd.f32 %v56, %v953
    %955 = vmatmul.f32.gmra.mxu0 %v928
    %v956 = vpop.f32.mrf.mxu0
    %v957 = vadd.f32 %v57, %v956
    %958 = vdwg.mxu0
    %vm959 = vcmask 130048
    %v960 = vsel %vm959, %v849, -inf
    %961 = vmax.xlane.f32.xlu0 %v960
    %v962 = vpop.xlane.xlu0 %961
    %v963 = vsel %vm959, %v852, -inf
    %964 = vmax.xlane.f32.xlu0 %v963
    %v965 = vpop.xlane.xlu0 %964
    %v966 = vsel %vm959, %v884, -inf
    %967 = vmax.xlane.f32.xlu0 %v966
    %v968 = vpop.xlane.xlu0 %967
    %v969 = vsel %vm959, %v887, -inf
    %970 = vmax.xlane.f32.xlu0 %v969
    %v971 = vpop.xlane.xlu0 %970
    %v972 = vsel %vm959, %v919, -inf
    %973 = vmax.xlane.f32.xlu0 %v972
    %v974 = vpop.xlane.xlu0 %973
    %v975 = vsel %vm959, %v922, -inf
    %976 = vmax.xlane.f32.xlu0 %v975
    %v977 = vpop.xlane.xlu0 %976
    %v978 = vsel %vm959, %v954, -inf
    %979 = vmax.xlane.f32.xlu0 %v978
    %v980 = vpop.xlane.xlu0 %979
    %v981 = vsel %vm959, %v957, -inf
    %982 = vmax.xlane.f32.xlu0 %v981
    %v983 = vpop.xlane.xlu0 %982
    %v984 = vsub.f32 %v849, %v962
    %v985 = vsub.f32 %v852, %v965
    %v986 = vsub.f32 %v884, %v968
    %v987 = vsub.f32 %v887, %v971
    %v988 = vsub.f32 %v919, %v974
    %v989 = vsub.f32 %v922, %v977
    %v990 = vsub.f32 %v954, %v980
    %v991 = vsub.f32 %v957, %v983
    %v992 = vmul.f32 %v984, 1.442695
    %v993 = vpow.pop %v992
    %v994 = vmul.f32 %v985, 1.442695
    %v995 = vpow.pop %v994
    %v996 = vmul.f32 %v986, 1.442695
    %v997 = vpow.pop %v996
    %v998 = vmul.f32 %v987, 1.442695
    %v999 = vpow.pop %v998
    %v1000 = vmul.f32 %v988, 1.442695
    %v1001 = vpow.pop %v1000
    %v1002 = vmul.f32 %v989, 1.442695
    %v1003 = vpow.pop %v1002
    %v1004 = vmul.f32 %v990, 1.442695
    %v1005 = vpow.pop %v1004
    %v1006 = vmul.f32 %v991, 1.442695
    %v1007 = vpow.pop %v1006
    %v1008 = vsel %vm959, %v993, 0.0
    %1009 = vadd.xlane.f32.xlu0 %v1008
    %v1010 = vpop.xlane.xlu0 %1009
    %v1011 = vsel %vm959, %v995, 0.0
    %1012 = vadd.xlane.f32.xlu0 %v1011
    %v1013 = vpop.xlane.xlu0 %1012
    %v1014 = vsel %vm959, %v997, 0.0
    %1015 = vadd.xlane.f32.xlu0 %v1014
    %v1016 = vpop.xlane.xlu0 %1015
    %v1017 = vsel %vm959, %v999, 0.0
    %1018 = vadd.xlane.f32.xlu0 %v1017
    %v1019 = vpop.xlane.xlu0 %1018
    %v1020 = vsel %vm959, %v1001, 0.0
    %1021 = vadd.xlane.f32.xlu0 %v1020
    %v1022 = vpop.xlane.xlu0 %1021
    %v1023 = vsel %vm959, %v1003, 0.0
    %1024 = vadd.xlane.f32.xlu0 %v1023
    %v1025 = vpop.xlane.xlu0 %1024
    %v1026 = vsel %vm959, %v1005, 0.0
    %1027 = vadd.xlane.f32.xlu0 %v1026
    %v1028 = vpop.xlane.xlu0 %1027
    %v1029 = vsel %vm959, %v1007, 0.0
    %1030 = vadd.xlane.f32.xlu0 %v1029
    %v1031 = vpop.xlane.xlu0 %1030
    %v1033 = vsel %vm959, %v993, 0
    %v1036 = vsel %vm959, %v995, 0
    %1038 = vmatpush.msra.mxu0 0.0
    %1039 = vmatpush.msra.mxu0 0.0
    %1040 = vmatpush.msra.mxu0 0.0
    %1041 = vmatpush.msra.mxu0 0.0
    %1042 = vmatpush.msra.mxu0 0.0
    %1043 = vmatpush.msra.mxu0 0.0
    %1044 = vmatpush.msra.mxu0 0.0
    %1045 = vmatpush.msra.mxu0 0.0
    %1046 = vmatpush.msra.mxu0 0.0
    %1047 = vmatpush.msra.mxu0 0.0
    %1048 = vmatpush.msra.mxu0 0.0
    %1049 = vmatpush.msra.mxu0 0.0
    %1050 = vmatpush.msra.mxu0 0.0
    %1051 = vmatpush.msra.mxu0 0.0
    %1052 = vmatpush.msra.mxu0 %v811
    %1053 = vmatpush.msra.mxu0 %v757
    %1054 = vmatmul.f32.gmra.mxu0 %v1033
    %v1055 = vpop.f32.mrf.mxu0
    %v1056 = vadd.f32 0.0, %v1055
    %1057 = vmatmul.f32.gmra.mxu0 %v1036
    %v1058 = vpop.f32.mrf.mxu0
    %v1059 = vadd.f32 0.0, %v1058
    %1060 = vdwg.mxu0
    %v1062 = vsel %vm959, %v997, 0
    %v1065 = vsel %vm959, %v999, 0
    %1067 = vmatpush.msra.mxu0 0.0
    %1068 = vmatpush.msra.mxu0 0.0
    %1069 = vmatpush.msra.mxu0 0.0
    %1070 = vmatpush.msra.mxu0 0.0
    %1071 = vmatpush.msra.mxu0 0.0
    %1072 = vmatpush.msra.mxu0 0.0
    %1073 = vmatpush.msra.mxu0 0.0
    %1074 = vmatpush.msra.mxu0 0.0
    %1075 = vmatpush.msra.mxu0 0.0
    %1076 = vmatpush.msra.mxu0 0.0
    %1077 = vmatpush.msra.mxu0 0.0
    %1078 = vmatpush.msra.mxu0 0.0
    %1079 = vmatpush.msra.mxu0 0.0
    %1080 = vmatpush.msra.mxu0 0.0
    %1081 = vmatpush.msra.mxu0 %v813
    %1082 = vmatpush.msra.mxu0 %v759
    %1083 = vmatmul.f32.gmra.mxu0 %v1062
    %v1084 = vpop.f32.mrf.mxu0
    %v1085 = vadd.f32 0.0, %v1084
    %1086 = vmatmul.f32.gmra.mxu0 %v1065
    %v1087 = vpop.f32.mrf.mxu0
    %v1088 = vadd.f32 0.0, %v1087
    %1089 = vdwg.mxu0
    %v1091 = vsel %vm959, %v1001, 0
    %v1094 = vsel %vm959, %v1003, 0
    %1096 = vmatpush.msra.mxu0 0.0
    %1097 = vmatpush.msra.mxu0 0.0
    %1098 = vmatpush.msra.mxu0 0.0
    %1099 = vmatpush.msra.mxu0 0.0
    %1100 = vmatpush.msra.mxu0 0.0
    %1101 = vmatpush.msra.mxu0 0.0
    %1102 = vmatpush.msra.mxu0 0.0
    %1103 = vmatpush.msra.mxu0 0.0
    %1104 = vmatpush.msra.mxu0 0.0
    %1105 = vmatpush.msra.mxu0 0.0
    %1106 = vmatpush.msra.mxu0 0.0
    %1107 = vmatpush.msra.mxu0 0.0
    %1108 = vmatpush.msra.mxu0 0.0
    %1109 = vmatpush.msra.mxu0 0.0
    %1110 = vmatpush.msra.mxu0 %v815
    %1111 = vmatpush.msra.mxu0 %v761
    %1112 = vmatmul.f32.gmra.mxu0 %v1091
    %v1113 = vpop.f32.mrf.mxu0
    %v1114 = vadd.f32 0.0, %v1113
    %1115 = vmatmul.f32.gmra.mxu0 %v1094
    %v1116 = vpop.f32.mrf.mxu0
    %v1117 = vadd.f32 0.0, %v1116
    %1118 = vdwg.mxu0
    %v1120 = vsel %vm959, %v1005, 0
    %v1123 = vsel %vm959, %v1007, 0
    %1125 = vmatpush.msra.mxu0 0.0
    %1126 = vmatpush.msra.mxu0 0.0
    %1127 = vmatpush.msra.mxu0 0.0
    %1128 = vmatpush.msra.mxu0 0.0
    %1129 = vmatpush.msra.mxu0 0.0
    %1130 = vmatpush.msra.mxu0 0.0
    %1131 = vmatpush.msra.mxu0 0.0
    %1132 = vmatpush.msra.mxu0 0.0
    %1133 = vmatpush.msra.mxu0 0.0
    %1134 = vmatpush.msra.mxu0 0.0
    %1135 = vmatpush.msra.mxu0 0.0
    %1136 = vmatpush.msra.mxu0 0.0
    %1137 = vmatpush.msra.mxu0 0.0
    %1138 = vmatpush.msra.mxu0 0.0
    %1139 = vmatpush.msra.mxu0 %v817
    %1140 = vmatpush.msra.mxu0 %v763
    %1141 = vmatmul.f32.gmra.mxu0 %v1120
    %v1142 = vpop.f32.mrf.mxu0
    %v1143 = vadd.f32 0.0, %v1142
    %1144 = vmatmul.f32.gmra.mxu0 %v1123
    %v1145 = vpop.f32.mrf.mxu0
    %v1146 = vadd.f32 0.0, %v1145
    %1147 = vdwg.mxu0
    %v1148 = vrcp.pop %v1010
    %v1149 = vmul.f32 %v1010, %v1148
    %v1150 = vsub.f32 1.0, %v1149
    %v1151 = vmul.f32 %v1148, %v1150
    %v1152 = vadd.f32 %v1148, %v1151
    %vm1153 = vweird.f32 %v1010
    %vm1154 = vweird.f32 %v1148
    %vm1155 = vmor %vm1153, %vm1154
    %v1156 = vsel %vm1155, %v1148, %v1152
    %v1157 = vand.u32 2147483647, %v1010
    %vm1158 = vcmp.eq.f32.partialorder %v1157, 8.507059e+37
    %v1159 = vand.u32 %v1010, 2147483648
    %v1160 = vor.u32 1.1754944e-38, %v1159
    %v1161 = vsel %vm1158, %v1160, %v1156
    %v1162 = vrcp.pop %v1013
    %v1163 = vmul.f32 %v1013, %v1162
    %v1164 = vsub.f32 1.0, %v1163
    %v1165 = vmul.f32 %v1162, %v1164
    %v1166 = vadd.f32 %v1162, %v1165
    %vm1167 = vweird.f32 %v1013
    %vm1168 = vweird.f32 %v1162
    %vm1169 = vmor %vm1167, %vm1168
    %v1170 = vsel %vm1169, %v1162, %v1166
    %v1171 = vand.u32 2147483647, %v1013
    %vm1172 = vcmp.eq.f32.partialorder %v1171, 8.507059e+37
    %v1173 = vand.u32 %v1013, 2147483648
    %v1174 = vor.u32 1.1754944e-38, %v1173
    %v1175 = vsel %vm1172, %v1174, %v1170
    %v1176 = vrcp.pop %v1016
    %v1177 = vmul.f32 %v1016, %v1176
    %v1178 = vsub.f32 1.0, %v1177
    %v1179 = vmul.f32 %v1176, %v1178
    %v1180 = vadd.f32 %v1176, %v1179
    %vm1181 = vweird.f32 %v1016
    %vm1182 = vweird.f32 %v1176
    %vm1183 = vmor %vm1181, %vm1182
    %v1184 = vsel %vm1183, %v1176, %v1180
    %v1185 = vand.u32 2147483647, %v1016
    %vm1186 = vcmp.eq.f32.partialorder %v1185, 8.507059e+37
    %v1187 = vand.u32 %v1016, 2147483648
    %v1188 = vor.u32 1.1754944e-38, %v1187
    %v1189 = vsel %vm1186, %v1188, %v1184
    %v1190 = vrcp.pop %v1019
    %v1191 = vmul.f32 %v1019, %v1190
    %v1192 = vsub.f32 1.0, %v1191
    %v1193 = vmul.f32 %v1190, %v1192
    %v1194 = vadd.f32 %v1190, %v1193
    %vm1195 = vweird.f32 %v1019
    %vm1196 = vweird.f32 %v1190
    %vm1197 = vmor %vm1195, %vm1196
    %v1198 = vsel %vm1197, %v1190, %v1194
    %v1199 = vand.u32 2147483647, %v1019
    %vm1200 = vcmp.eq.f32.partialorder %v1199, 8.507059e+37
    %v1201 = vand.u32 %v1019, 2147483648
    %v1202 = vor.u32 1.1754944e-38, %v1201
    %v1203 = vsel %vm1200, %v1202, %v1198
    %v1204 = vrcp.pop %v1022
    %v1205 = vmul.f32 %v1022, %v1204
    %v1206 = vsub.f32 1.0, %v1205
    %v1207 = vmul.f32 %v1204, %v1206
    %v1208 = vadd.f32 %v1204, %v1207
    %vm1209 = vweird.f32 %v1022
    %vm1210 = vweird.f32 %v1204
    %vm1211 = vmor %vm1209, %vm1210
    %v1212 = vsel %vm1211, %v1204, %v1208
    %v1213 = vand.u32 2147483647, %v1022
    %vm1214 = vcmp.eq.f32.partialorder %v1213, 8.507059e+37
    %v1215 = vand.u32 %v1022, 2147483648
    %v1216 = vor.u32 1.1754944e-38, %v1215
    %v1217 = vsel %vm1214, %v1216, %v1212
    %v1218 = vrcp.pop %v1025
    %v1219 = vmul.f32 %v1025, %v1218
    %v1220 = vsub.f32 1.0, %v1219
    %v1221 = vmul.f32 %v1218, %v1220
    %v1222 = vadd.f32 %v1218, %v1221
    %vm1223 = vweird.f32 %v1025
    %vm1224 = vweird.f32 %v1218
    %vm1225 = vmor %vm1223, %vm1224
    %v1226 = vsel %vm1225, %v1218, %v1222
    %v1227 = vand.u32 2147483647, %v1025
    %vm1228 = vcmp.eq.f32.partialorder %v1227, 8.507059e+37
    %v1229 = vand.u32 %v1025, 2147483648
    %v1230 = vor.u32 1.1754944e-38, %v1229
    %v1231 = vsel %vm1228, %v1230, %v1226
    %v1232 = vrcp.pop %v1028
    %v1233 = vmul.f32 %v1028, %v1232
    %v1234 = vsub.f32 1.0, %v1233
    %v1235 = vmul.f32 %v1232, %v1234
    %v1236 = vadd.f32 %v1232, %v1235
    %vm1237 = vweird.f32 %v1028
    %vm1238 = vweird.f32 %v1232
    %vm1239 = vmor %vm1237, %vm1238
    %v1240 = vsel %vm1239, %v1232, %v1236
    %v1241 = vand.u32 2147483647, %v1028
    %vm1242 = vcmp.eq.f32.partialorder %v1241, 8.507059e+37
    %v1243 = vand.u32 %v1028, 2147483648
    %v1244 = vor.u32 1.1754944e-38, %v1243
    %v1245 = vsel %vm1242, %v1244, %v1240
    %v1246 = vrcp.pop %v1031
    %v1247 = vmul.f32 %v1031, %v1246
    %v1248 = vsub.f32 1.0, %v1247
    %v1249 = vmul.f32 %v1246, %v1248
    %v1250 = vadd.f32 %v1246, %v1249
    %vm1251 = vweird.f32 %v1031
    %vm1252 = vweird.f32 %v1246
    %vm1253 = vmor %vm1251, %vm1252
    %v1254 = vsel %vm1253, %v1246, %v1250
    %v1255 = vand.u32 2147483647, %v1031
    %vm1256 = vcmp.eq.f32.partialorder %v1255, 8.507059e+37
    %v1257 = vand.u32 %v1031, 2147483648
    %v1258 = vor.u32 1.1754944e-38, %v1257
    %v1259 = vsel %vm1256, %v1258, %v1254
    %v1260 = vmul.f32 %v1056, %v1161
    %v1261 = vmul.f32 %v1059, %v1175
    %v1262 = vmul.f32 %v1085, %v1189
    %v1263 = vmul.f32 %v1088, %v1203
    %v1264 = vmul.f32 %v1114, %v1217
    %v1265 = vmul.f32 %v1117, %v1231
    %v1266 = vmul.f32 %v1143, %v1245
    %v1267 = vmul.f32 %v1146, %v1259
    %v1268 = vrot.slane %v1264, 4
    %v1269 = vsel %vm110, %v1268, %v1260
    %v1270 = vrot.slane %v1260, 4
    %v1271 = vsel %vm110, %v1264, %v1270
    %v1273 = vunpack.c.l.s4 1983009808
    %v1274 = vunpack.c.0.s8 %v1273
    %v1275 = vperm.slane %v1269, %v1274
    %v1277 = vunpack.c.l.s4 1983009808
    %v1278 = vunpack.c.0.s8 %v1277
    %v1279 = vperm.slane %v1271, %v1278
    %v1280 = vrot.slane %v1266, 4
    %v1281 = vsel %vm110, %v1280, %v1262
    %v1282 = vrot.slane %v1262, 4
    %v1283 = vsel %vm110, %v1266, %v1282
    %v1285 = vunpack.c.l.s4 1983009808
    %v1286 = vunpack.c.0.s8 %v1285
    %v1287 = vperm.slane %v1281, %v1286
    %v1289 = vunpack.c.l.s4 1983009808
    %v1290 = vunpack.c.0.s8 %v1289
    %v1291 = vperm.slane %v1283, %v1290
    %v1292 = vrot.slane %v1287, 4
    %v1293 = vsel %vm110, %v1292, %v1275
    %v1294 = vrot.slane %v1275, 4
    %v1295 = vsel %vm110, %v1287, %v1294
    %v1297 = vunpack.c.l.s4 1934713408
    %v1298 = vunpack.c.0.s8 %v1297
    %v1299 = vperm.slane %v1293, %v1298
    %v1301 = vunpack.c.l.s4 1934713408
    %v1302 = vunpack.c.0.s8 %v1301
    %v1303 = vperm.slane %v1295, %v1302
    %v1304 = vrot.slane %v1291, 4
    %v1305 = vsel %vm110, %v1304, %v1279
    %v1306 = vrot.slane %v1279, 4
    %v1307 = vsel %vm110, %v1291, %v1306
    %v1309 = vunpack.c.l.s4 1934713408
    %v1310 = vunpack.c.0.s8 %v1309
    %v1311 = vperm.slane %v1305, %v1310
    %v1313 = vunpack.c.l.s4 1934713408
    %v1314 = vunpack.c.0.s8 %v1313
    %v1315 = vperm.slane %v1307, %v1314
    %v1316 = vrot.slane %v1299, 4
    %v1317 = vsel %vm110, 0.0, %v1316
    %v1318 = vrot.slane %v1303, 4
    %v1319 = vsel %vm110, 0.0, %v1318
    %v1320 = vrot.slane %v1311, 4
    %v1321 = vsel %vm110, 0.0, %v1320
    %v1322 = vrot.slane %v1315, 4
    %v1323 = vsel %vm110, 0.0, %v1322
    %v1324 = vrot.slane %v1265, 4
    %v1325 = vsel %vm110, %v1324, %v1261
    %v1326 = vrot.slane %v1261, 4
    %v1327 = vsel %vm110, %v1265, %v1326
    %v1329 = vunpack.c.l.s4 1983009808
    %v1330 = vunpack.c.0.s8 %v1329
    %v1331 = vperm.slane %v1325, %v1330
    %v1333 = vunpack.c.l.s4 1983009808
    %v1334 = vunpack.c.0.s8 %v1333
    %v1335 = vperm.slane %v1327, %v1334
    %v1336 = vrot.slane %v1267, 4
    %v1337 = vsel %vm110, %v1336, %v1263
    %v1338 = vrot.slane %v1263, 4
    %v1339 = vsel %vm110, %v1267, %v1338
    %v1341 = vunpack.c.l.s4 1983009808
    %v1342 = vunpack.c.0.s8 %v1341
    %v1343 = vperm.slane %v1337, %v1342
    %v1345 = vunpack.c.l.s4 1983009808
    %v1346 = vunpack.c.0.s8 %v1345
    %v1347 = vperm.slane %v1339, %v1346
    %v1348 = vrot.slane %v1343, 4
    %v1349 = vsel %vm110, %v1348, %v1331
    %v1350 = vrot.slane %v1331, 4
    %v1351 = vsel %vm110, %v1343, %v1350
    %v1353 = vunpack.c.l.s4 1934713408
    %v1354 = vunpack.c.0.s8 %v1353
    %v1355 = vperm.slane %v1349, %v1354
    %v1357 = vunpack.c.l.s4 1934713408
    %v1358 = vunpack.c.0.s8 %v1357
    %v1359 = vperm.slane %v1351, %v1358
    %v1360 = vrot.slane %v1347, 4
    %v1361 = vsel %vm110, %v1360, %v1335
    %v1362 = vrot.slane %v1335, 4
    %v1363 = vsel %vm110, %v1347, %v1362
    %v1365 = vunpack.c.l.s4 1934713408
    %v1366 = vunpack.c.0.s8 %v1365
    %v1367 = vperm.slane %v1361, %v1366
    %v1369 = vunpack.c.l.s4 1934713408
    %v1370 = vunpack.c.0.s8 %v1369
    %v1371 = vperm.slane %v1363, %v1370
    %v1372 = vrot.slane %v1355, 4
    %v1373 = vsel %vm110, 0.0, %v1372
    %v1374 = vrot.slane %v1359, 4
    %v1375 = vsel %vm110, 0.0, %v1374
    %v1376 = vrot.slane %v1367, 4
    %v1377 = vsel %vm110, 0.0, %v1376
    %v1378 = vrot.slane %v1371, 4
    %v1379 = vsel %vm110, 0.0, %v1378
    %v1380 = vsel %vm110, %v1318, %v1299
    %v1382 = vunpack.c.l.s4 1983009808
    %v1383 = vunpack.c.0.s8 %v1382
    %v1384 = vperm.slane %v1380, %v1383
    %v1385 = vrot.slane %v1319, 4
    %v1386 = vsel %vm110, %v1385, %v1317
    %v1388 = vunpack.c.l.s4 1983009808
    %v1389 = vunpack.c.0.s8 %v1388
    %v1390 = vperm.slane %v1386, %v1389
    %v1391 = vsel %vm110, %v1322, %v1311
    %v1393 = vunpack.c.l.s4 1983009808
    %v1394 = vunpack.c.0.s8 %v1393
    %v1395 = vperm.slane %v1391, %v1394
    %v1396 = vrot.slane %v1323, 4
    %v1397 = vsel %vm110, %v1396, %v1321
    %v1399 = vunpack.c.l.s4 1983009808
    %v1400 = vunpack.c.0.s8 %v1399
    %v1401 = vperm.slane %v1397, %v1400
    %v1402 = vrot.slane %v1390, 4
    %v1403 = vsel %vm110, %v1402, %v1384
    %v1404 = vrot.slane %v1384, 4
    %v1405 = vsel %vm110, %v1390, %v1404
    %v1407 = vunpack.c.l.s4 1934713408
    %v1408 = vunpack.c.0.s8 %v1407
    %v1409 = vperm.slane %v1403, %v1408
    %v1411 = vunpack.c.l.s4 1934713408
    %v1412 = vunpack.c.0.s8 %v1411
    %v1413 = vperm.slane %v1405, %v1412
    %v1414 = vrot.slane %v1401, 4
    %v1415 = vsel %vm110, %v1414, %v1395
    %v1416 = vrot.slane %v1395, 4
    %v1417 = vsel %vm110, %v1401, %v1416
    %v1419 = vunpack.c.l.s4 1934713408
    %v1420 = vunpack.c.0.s8 %v1419
    %v1421 = vperm.slane %v1415, %v1420
    %v1423 = vunpack.c.l.s4 1934713408
    %v1424 = vunpack.c.0.s8 %v1423
    %v1425 = vperm.slane %v1417, %v1424
    %v1426 = vrot.slane %v1421, 4
    %v1427 = vsel %vm110, %v1426, %v1409
    %v1428 = vrot.slane %v1409, 4
    %v1429 = vsel %vm110, %v1421, %v1428
    %v1430 = vrot.slane %v1425, 4
    %v1431 = vsel %vm110, %v1430, %v1413
    %v1432 = vrot.slane %v1413, 4
    %v1433 = vsel %vm110, %v1425, %v1432
    %v1434 = vsel %vm110, %v1374, %v1355
    %v1436 = vunpack.c.l.s4 1983009808
    %v1437 = vunpack.c.0.s8 %v1436
    %v1438 = vperm.slane %v1434, %v1437
    %v1439 = vrot.slane %v1375, 4
    %v1440 = vsel %vm110, %v1439, %v1373
    %v1442 = vunpack.c.l.s4 1983009808
    %v1443 = vunpack.c.0.s8 %v1442
    %v1444 = vperm.slane %v1440, %v1443
    %v1445 = vsel %vm110, %v1378, %v1367
    %v1447 = vunpack.c.l.s4 1983009808
    %v1448 = vunpack.c.0.s8 %v1447
    %v1449 = vperm.slane %v1445, %v1448
    %v1450 = vrot.slane %v1379, 4
    %v1451 = vsel %vm110, %v1450, %v1377
    %v1453 = vunpack.c.l.s4 1983009808
    %v1454 = vunpack.c.0.s8 %v1453
    %v1455 = vperm.slane %v1451, %v1454
    %v1456 = vrot.slane %v1444, 4
    %v1457 = vsel %vm110, %v1456, %v1438
    %v1458 = vrot.slane %v1438, 4
    %v1459 = vsel %vm110, %v1444, %v1458
    %v1461 = vunpack.c.l.s4 1934713408
    %v1462 = vunpack.c.0.s8 %v1461
    %v1463 = vperm.slane %v1457, %v1462
    %v1465 = vunpack.c.l.s4 1934713408
    %v1466 = vunpack.c.0.s8 %v1465
    %v1467 = vperm.slane %v1459, %v1466
    %v1468 = vrot.slane %v1455, 4
    %v1469 = vsel %vm110, %v1468, %v1449
    %v1470 = vrot.slane %v1449, 4
    %v1471 = vsel %vm110, %v1455, %v1470
    %v1473 = vunpack.c.l.s4 1934713408
    %v1474 = vunpack.c.0.s8 %v1473
    %v1475 = vperm.slane %v1469, %v1474
    %v1477 = vunpack.c.l.s4 1934713408
    %v1478 = vunpack.c.0.s8 %v1477
    %v1479 = vperm.slane %v1471, %v1478
    %v1480 = vrot.slane %v1475, 4
    %v1481 = vsel %vm110, %v1480, %v1463
    %v1482 = vrot.slane %v1463, 4
    %v1483 = vsel %vm110, %v1475, %v1482
    %v1484 = vrot.slane %v1479, 4
    %v1485 = vsel %vm110, %v1484, %v1467
    %v1486 = vrot.slane %v1467, 4
    %v1487 = vsel %vm110, %v1479, %v1486
    %1490 = vrot.lane.b32.xlu0 %v1429, 8
    %v1491 = vpop.permute.xlu0 %1490
    %1492 = vrot.lane.b32.xlu0 %v1483, 8
    %v1493 = vpop.permute.xlu0 %1492
    %1498 = vrot.lane.b32.xlu0 %v1431, 16
    %v1499 = vpop.permute.xlu0 %1498
    %1500 = vrot.lane.b32.xlu0 %v1485, 16
    %v1501 = vpop.permute.xlu0 %1500
    %1506 = vrot.lane.b32.xlu0 %v1433, 24
    %v1507 = vpop.permute.xlu0 %1506
    %1508 = vrot.lane.b32.xlu0 %v1487, 24
    %v1509 = vpop.permute.xlu0 %1508
    %v1512 = vsel %vm818, %v1427, %v1491
    %v1513 = vsel %vm818, %v1481, %v1493
    %v1514 = vsel %vm959, %v1512, %v1499
    %v1515 = vsel %vm959, %v1513, %v1501
    %vm1516 = vcmask 195584
    %v1517 = vsel %vm1516, %v1514, %v1507
    %v1518 = vsel %vm1516, %v1515, %v1509
    %v1519 = vperm.slane %v55, 0
    %v1521 = vsel %vm59, %v1517, 0
    %v1524 = vsel %vm59, %v1518, 0
    %1526 = vmatpush.msra.mxu0 0.0
    %1527 = vmatpush.msra.mxu0 0.0
    %1528 = vmatpush.msra.mxu0 0.0
    %1529 = vmatpush.msra.mxu0 0.0
    %1530 = vmatpush.msra.mxu0 0.0
    %1531 = vmatpush.msra.mxu0 0.0
    %1532 = vmatpush.msra.mxu0 0.0
    %1533 = vmatpush.msra.mxu0 0.0
    %1534 = vmatpush.msra.mxu0 0.0
    %1535 = vmatpush.msra.mxu0 0.0
    %1536 = vmatpush.msra.mxu0 0.0
    %1537 = vmatpush.msra.mxu0 0.0
    %1538 = vmatpush.msra.mxu0 %v54
    %1539 = vmatpush.msra.mxu0 %v53
    %1540 = vmatpush.msra.mxu0 %v52
    %1541 = vmatpush.msra.mxu0 %v51
    %1542 = vmatmul.f32.gmra.mxu0 %v1521
    %v1543 = vpop.f32.mrf.mxu0
    %v1544 = vadd.f32 %v1519, %v1543
    %1545 = vmatmul.f32.gmra.mxu0 %v1524
    %v1546 = vpop.f32.mrf.mxu0
    %v1547 = vadd.f32 %v1519, %v1546
    %1548 = vdwg.mxu0
    %1549 = vst.msk [vmem:[#allocation7] sm:$0xff] %vm59, %v1544
    %1550 = vst.msk [vmem:[#allocation7 + $0x8] sm:$0xff] %vm59, %v1547
    // Predicated region
    $region18: #{causal_self_attention.1} parent=1 // pred_check
      _
    $region19: #{causal_self_attention.1} parent=1 // pred_check_branch
      %1552 = sbr.rel (0) target = $region21
    $region20: #{causal_self_attention.1} parent=1 // pred_region
      %1554 = vsyncadd [#allocation4], 0
      %s1555 = sshll.u32 [#allocation7], 4
      %s1556 = int_to_ptr.vmem [resolvable:$true] %s1555
      %s1557 = sshll.u32 %s2, 4
      %s1558 = int_to_ptr.hbm [resolvable:$true] %s1557
      %1563 = dma.vmem_to_hbm [thread:$0]  %s1556, 256, %s1558, [#allocation4], 128, 128, 8
    $region21: #{causal_self_attention.1} parent=1 // pred_fallthru
      _
    // Predicated region
    $region22: #{causal_self_attention.1} parent=1 // pred_check
      _
    $region23: #{causal_self_attention.1} parent=1 // pred_check_branch
      %1565 = sbr.rel (0) target = $region25
    $region24: #{causal_self_attention.1} parent=1 // pred_region
      %1567 = dma.done [#allocation4], 256
    $region25: #{causal_self_attention.1} parent=1 // pred_fallthru
      _
    %1568 = vsyncpa [#allocation3], 1
    %1569 = vsyncpa [#allocation6], 1
    %1570 = vsyncpa [#allocation4], 1

</llo_original>
